<compile_context>
chip_gen: v7x
topology: tpu7x:2x2x1
jax: 0.10.0
libtpu: 0.0.40
codegen_flags: <defaults>
</compile_context>

<pallas_src>
import jax
import jax.numpy as jnp
from jax import lax
from jax.experimental import pallas as pl
from jax.experimental.pallas import tpu as pltpu

LN_EPS = 1e-5  # torch.nn.LayerNorm default


def value_net_kernel(x_ref, w1_ref, b1_ref, gw2_ref, c_ref, o_ref):
    # --- Linear 1 on the MXU (f32 accumulation regardless of input dtype) ---
    h = jnp.dot(x_ref[...], w1_ref[...], preferred_element_type=jnp.float32)
    h = h + b1_ref[...]

    # --- ReLU ---
    h = jnp.maximum(h, 0.0)

    # --- LayerNorm stats in one pass: two back-to-back XLU row-reductions ---
    inv_h = 1.0 / h.shape[-1]
    s = jnp.sum(h, axis=-1, keepdims=True)
    ss = jnp.sum(h * h, axis=-1, keepdims=True)
    mean = s * inv_h
    var = ss * inv_h - mean * mean          # biased variance (torch LayerNorm)
    inv_std = lax.rsqrt(var + LN_EPS)
    centered = h - mean

    # --- gamma / w2 / b2 folded into one reduction (avoids N=1 MXU matmul):
    #     out = sum(centered * (gamma*w2), -1) * inv_std + (beta@w2 + b2)
    out = jnp.sum(centered * gw2_ref[...], axis=-1, keepdims=True) * inv_std
    out = out + c_ref[...]
    o_ref[...] = out.astype(o_ref.dtype)


def value_network_forward(x, params, *, block_b=1024, compute_dtype=None):
    """x: (B, n_states). Returns (B, 1) float32.

    block_b: batch tile size (>=512 recommended for large B; clamped for small B).
    compute_dtype: e.g. jnp.bfloat16 to halve HBM bytes for x / w1.
    """
    B, n_states = x.shape
    H = params["w1"].shape[1]

    w1 = params["w1"]
    if compute_dtype is not None:
        x = x.astype(compute_dtype)
        w1 = w1.astype(compute_dtype)

    # Post-matmul VPU math stays in f32 (v5e VPU/EUP have no bf16).
    b1 = params["b1"].astype(jnp.float32).reshape(1, H)
    gamma = params["gamma"].astype(jnp.float32).reshape(1, H)
    beta = params["beta"].astype(jnp.float32).reshape(1, H)
    w2 = params["w2"].astype(jnp.float32).reshape(H, 1)
    b2 = params["b2"].astype(jnp.float32).reshape(1, 1)
    gw2 = gamma * w2.reshape(1, H)          # (1, H)
    c = beta @ w2 + b2                      # (1, 1) scalar offset

    # Batch tiling: tile must be a multiple of 8; pad B up to a whole tile.
    tb = min(block_b, ((B + 7) // 8) * 8)
    tb = max(8, (tb // 8) * 8)
    b_pad = ((B + tb - 1) // tb) * tb
    if b_pad != B:
        x = jnp.pad(x, ((0, b_pad - B), (0, 0)))

    out = pl.pallas_call(
        value_net_kernel,
        out_shape=jax.ShapeDtypeStruct((b_pad, 1), jnp.float32),
        grid=(b_pad // tb,),
        in_specs=[
            pl.BlockSpec((tb, n_states), lambda i: (i, 0)),   # x: streamed per tile
            pl.BlockSpec((n_states, H), lambda i: (0, 0)),    # w1: resident
            pl.BlockSpec((1, H), lambda i: (0, 0)),           # b1
            pl.BlockSpec((1, H), lambda i: (0, 0)),           # gamma * w2
            pl.BlockSpec((1, 1), lambda i: (0, 0)),           # beta @ w2 + b2
        ],
        out_specs=pl.BlockSpec((tb, 1), lambda i: (i, 0)),
        compiler_params=pltpu.CompilerParams(
            dimension_semantics=("parallel",),                # shard batch tiles on v7x
        ),
        # TODO(synk): optional v5e-only tweak — lane-dense (1, TB) output blocks to
        # avoid masked vst on the (TB, 1) store if profiling shows stores binding.
    )(x, w1, b1, gw2, c)
    return out[:B]


def init_params(key, n_states, hidden_dim=64):
    """Deterministic init mimicking PyTorch defaults (uniform for Linear,
    ones/zeros for LayerNorm affine). Linear weights stored as (in, out)."""
    k1, k2, k3, k4 = jax.random.split(key, 4)
    lim1 = 1.0 / jnp.sqrt(n_states)
    lim2 = 1.0 / jnp.sqrt(hidden_dim)
    return {
        "w1": jax.random.uniform(k1, (n_states, hidden_dim), jnp.float32, -lim1, lim1),
        "b1": jax.random.uniform(k2, (1, hidden_dim), jnp.float32, -lim1, lim1),
        "gamma": jnp.ones((1, hidden_dim), jnp.float32),
        "beta": jnp.zeros((1, hidden_dim), jnp.float32),
        "w2": jax.random.uniform(k3, (hidden_dim, 1), jnp.float32, -lim2, lim2),
        "b2": jax.random.uniform(k4, (1, 1), jnp.float32, -lim2, lim2),
    }


def value_network_reference(x, params):
    h = x @ params["w1"] + params["b1"]
    h = jnp.maximum(h, 0.0)
    mean = jnp.mean(h, axis=-1, keepdims=True)
    var = jnp.mean((h - mean) ** 2, axis=-1, keepdims=True)
    h = (h - mean) / jnp.sqrt(var + LN_EPS)
    h = h * params["gamma"] + params["beta"]
    return h @ params["w2"] + params["b2"]


if __name__ == "__main__":
    key = jax.random.PRNGKey(0)
    k_x, k_p, k_x2 = jax.random.split(key, 3)

    n_states, hidden = 32, 64
    params = init_params(k_p, n_states, hidden)

    # 1) Small-batch smoke test (single tile).
    x_small = jax.random.normal(k_x, (8, n_states), jnp.float32)
    out_small = jax.block_until_ready(value_network_forward(x_small, params))
    ref_small = value_network_reference(x_small, params)
    assert out_small.shape == (8, 1)
    assert jnp.allclose(out_small, ref_small, atol=1e-4, rtol=1e-4), "f32 small mismatch"

    # 2) Multi-tile path with a ragged batch (exercises grid + padding).
    x_big = jax.random.normal(k_x2, (1000, n_states), jnp.float32)
    out_big = jax.block_until_ready(value_network_forward(x_big, params, block_b=256))
    ref_big = value_network_reference(x_big, params)
    assert out_big.shape == (1000, 1)
    assert jnp.allclose(out_big, ref_big, atol=1e-4, rtol=1e-4), "f32 tiled mismatch"

    # 3) bf16 input path (halves HBM traffic on x); loose tolerance vs f32 ref.
    out_bf16 = jax.block_until_ready(
        value_network_forward(x_big, params, block_b=256, compute_dtype=jnp.bfloat16))
    assert jnp.allclose(out_bf16, ref_big, atol=1e-1, rtol=1e-1), "bf16 mismatch"

    print("KERNEL_OK")
</pallas_src>

<mosaic_0001>
module attributes {stable_mosaic.version = 11 : i64} {
  func.func @value_net_kernel(%arg0: i32, %arg1: memref<8x32xf32, #tpu.memory_space<vmem>>, %arg2: memref<32x64xf32, #tpu.memory_space<vmem>>, %arg3: memref<1x64xf32, #tpu.memory_space<vmem>>, %arg4: memref<1x64xf32, #tpu.memory_space<vmem>>, %arg5: memref<1x1xf32, #tpu.memory_space<vmem>>, %arg6: memref<8x1xf32, #tpu.memory_space<vmem>>) attributes {dimension_semantics = [#tpu.dimension_semantics<parallel>], iteration_bounds = array<i64: 1>, scalar_prefetch = 0 : i64, scratch_operands = 0 : i64, tpu.core_type = #tpu.core_type<tc>, window_params = [{transform_indices = @transform_0, window_bounds = array<i64: 8, 32>}, {pipeline_mode = #tpu.pipeline_mode<synchronous>, transform_indices = @transform_1, window_bounds = array<i64: 32, 64>}, {pipeline_mode = #tpu.pipeline_mode<synchronous>, transform_indices = @transform_2, window_bounds = array<i64: 1, 64>}, {pipeline_mode = #tpu.pipeline_mode<synchronous>, transform_indices = @transform_3, window_bounds = array<i64: 1, 64>}, {pipeline_mode = #tpu.pipeline_mode<synchronous>, transform_indices = @transform_4, window_bounds = array<i64: 1, 1>}, {transform_indices = @transform_5, window_bounds = array<i64: 8, 1>}]} {
    %c0 = arith.constant 0 : index
    %c0_0 = arith.constant 0 : index
    %0 = vector.load %arg1[%c0, %c0_0] : memref<8x32xf32, #tpu.memory_space<vmem>>, vector<8x32xf32>
    %c0_1 = arith.constant 0 : index
    %c0_2 = arith.constant 0 : index
    %1 = vector.load %arg2[%c0_1, %c0_2] : memref<32x64xf32, #tpu.memory_space<vmem>>, vector<32x64xf32>
    %cst = arith.constant dense<0.000000e+00> : vector<8x64xf32>
    %2 = tpu.matmul %0, %1, %cst {dimension_numbers = #tpu.dot_dimension_numbers<[1], [0], [0], [1], [0, 0, 1, 1], [], []>} : vector<8x32xf32>, vector<32x64xf32>, vector<8x64xf32> -> vector<8x64xf32>
    %c0_3 = arith.constant 0 : index
    %c0_4 = arith.constant 0 : index
    %3 = vector.load %arg3[%c0_3, %c0_4] : memref<1x64xf32, #tpu.memory_space<vmem>>, vector<1x64xf32>
    %4 = vector.broadcast %3 : vector<1x64xf32> to vector<8x64xf32>
    %5 = arith.addf %2, %4 : vector<8x64xf32>
    %cst_5 = arith.constant 0.000000e+00 : f32
    %6 = vector.broadcast %cst_5 : f32 to vector<8x64xf32>
    %7 = arith.maximumf %5, %6 : vector<8x64xf32>
    %cst_6 = arith.constant dense<0.000000e+00> : vector<8xf32>
    %8 = vector.multi_reduction <add>, %7, %cst_6 [1] : vector<8x64xf32> to vector<8xf32>
    %9 = vector.shape_cast %8 : vector<8xf32> to vector<8x1xf32>
    %10 = arith.mulf %7, %7 : vector<8x64xf32>
    %cst_7 = arith.constant dense<0.000000e+00> : vector<8xf32>
    %11 = vector.multi_reduction <add>, %10, %cst_7 [1] : vector<8x64xf32> to vector<8xf32>
    %12 = vector.shape_cast %11 : vector<8xf32> to vector<8x1xf32>
    %cst_8 = arith.constant 1.562500e-02 : f32
    %13 = vector.broadcast %cst_8 : f32 to vector<8x1xf32>
    %14 = arith.mulf %9, %13 : vector<8x1xf32>
    %cst_9 = arith.constant 1.562500e-02 : f32
    %15 = vector.broadcast %cst_9 : f32 to vector<8x1xf32>
    %16 = arith.mulf %12, %15 : vector<8x1xf32>
    %17 = arith.mulf %14, %14 : vector<8x1xf32>
    %18 = arith.subf %16, %17 : vector<8x1xf32>
    %cst_10 = arith.constant 9.99999974E-6 : f32
    %19 = vector.broadcast %cst_10 : f32 to vector<8x1xf32>
    %20 = arith.addf %18, %19 : vector<8x1xf32>
    %21 = math.rsqrt %20 : vector<8x1xf32>
    %22 = vector.broadcast %14 : vector<8x1xf32> to vector<8x64xf32>
    %23 = arith.subf %7, %22 : vector<8x64xf32>
    %c0_11 = arith.constant 0 : index
    %c0_12 = arith.constant 0 : index
    %24 = vector.load %arg4[%c0_11, %c0_12] : memref<1x64xf32, #tpu.memory_space<vmem>>, vector<1x64xf32>
    %25 = vector.broadcast %24 : vector<1x64xf32> to vector<8x64xf32>
    %26 = arith.mulf %23, %25 : vector<8x64xf32>
    %cst_13 = arith.constant dense<0.000000e+00> : vector<8xf32>
    %27 = vector.multi_reduction <add>, %26, %cst_13 [1] : vector<8x64xf32> to vector<8xf32>
    %28 = vector.shape_cast %27 : vector<8xf32> to vector<8x1xf32>
    %29 = arith.mulf %28, %21 : vector<8x1xf32>
    %c0_14 = arith.constant 0 : index
    %c0_15 = arith.constant 0 : index
    %30 = vector.load %arg5[%c0_14, %c0_15] : memref<1x1xf32, #tpu.memory_space<vmem>>, vector<1x1xf32>
    %31 = vector.broadcast %30 : vector<1x1xf32> to vector<8x1xf32>
    %32 = arith.addf %29, %31 : vector<8x1xf32>
    %c0_16 = arith.constant 0 : index
    %c0_17 = arith.constant 0 : index
    %33 = vector.load %arg6[%c0_16, %c0_17] : memref<8x1xf32, #tpu.memory_space<vmem>>, vector<8x1xf32>
    tpu.vector_store %arg6[%c0_16, %c0_17], %32 {strides = array<i32>} : memref<8x1xf32, #tpu.memory_space<vmem>>, vector<8x1xf32>,
    return
  }
  func.func @transform_0(%arg0: i32) -> (i32, i32) {
    %c0_i32 = arith.constant 0 : i32
    %c0_i32_0 = arith.constant 0 : i32
    return %arg0, %c0_i32 : i32, i32
  }
  func.func @transform_1(%arg0: i32) -> (i32, i32) {
    %c0_i32 = arith.constant 0 : i32
    %c0_i32_0 = arith.constant 0 : i32
    %c0_i32_1 = arith.constant 0 : i32
    return %c0_i32, %c0_i32_0 : i32, i32
  }
  func.func @transform_2(%arg0: i32) -> (i32, i32) {
    %c0_i32 = arith.constant 0 : i32
    %c0_i32_0 = arith.constant 0 : i32
    %c0_i32_1 = arith.constant 0 : i32
    return %c0_i32, %c0_i32_0 : i32, i32
  }
  func.func @transform_3(%arg0: i32) -> (i32, i32) {
    %c0_i32 = arith.constant 0 : i32
    %c0_i32_0 = arith.constant 0 : i32
    %c0_i32_1 = arith.constant 0 : i32
    return %c0_i32, %c0_i32_0 : i32, i32
  }
  func.func @transform_4(%arg0: i32) -> (i32, i32) {
    %c0_i32 = arith.constant 0 : i32
    %c0_i32_0 = arith.constant 0 : i32
    %c0_i32_1 = arith.constant 0 : i32
    return %c0_i32, %c0_i32_0 : i32, i32
  }
  func.func @transform_5(%arg0: i32) -> (i32, i32) {
    %c0_i32 = arith.constant 0 : i32
    %c0_i32_0 = arith.constant 0 : i32
    return %arg0, %c0_i32 : i32, i32
  }
}

</mosaic_0001>

<llo_original>
// kernel: tpu_custom_call.1
$region0: #{tpu_custom_call.1}
  #allocation0 [shape = 'u32[]', space=smem, size = 0x4, offset = 0x4, fixed_abs, tag = 'smem constant byte address 0x4 - core index']
  #allocation1 [shape = 'u32[144,128]{1,0:T(1,128)}', space=vmem, size = 0x12000, scoped, tag = 'internal scratch']
  #allocation2 [shape = 'f32[1,1]{1,0:T(1,128)S(1)}', space=vmem, size = 0x200, scoped, tag = 'scoped memory for tpu_custom_call.1']
  %s0 = inlined_call_operand.hbm [shape: f32[8,32], index: 0, kind: input, shape index: {}]
  %s1 = inlined_call_operand.hbm [shape: f32[32,64], index: 1, kind: input, shape index: {}]
  %s2 = inlined_call_operand.vmem [shape: f32[1,64], index: 2, kind: input, shape index: {}]
  %s3 = inlined_call_operand.vmem [shape: f32[1,64], index: 3, kind: input, shape index: {}]
  %s4 = inlined_call_operand.<no memory space> [shape: f32[1,1], index: 4, kind: input, shape index: {}]
  %s5 = inlined_call_operand.vmem [shape: f32[8,1], index: 5, kind: output, shape index: {}]
  %s6 = sld [smem:[#allocation0]]
  $region38: #{tpu_custom_call.1} parent=0
    _
  %s8 = ssub.s32 1, %s6
  %s9 = scalar_select 0, %s8, %s6
  %v10 = vstv %s4
  %11 = vst [vmem:[#allocation2] sm:$0x1] %v10
  $region1: #{tpu_custom_call.1} parent=0
    #allocation3 [shape = 'u8[4096]{0}', space=vmem, size = 0x1000, scoped, tag = 'input window, operand 0, single buffered']
    #allocation4 [shape = 's32[1]{0}', space=sflag, size = 0x4, scoped, tag = 'scoped memory for tpu_custom_call.1']
    #allocation5 [shape = 'u8[16384]{0}', space=vmem, size = 0x4000, scoped, tag = 'input window, operand 1, single buffered']
    #allocation6 [shape = 's32[1]{0}', space=sflag, size = 0x4, scoped, tag = 'scoped memory for tpu_custom_call.1']
    %12 = vsyncpa [#allocation4], 0
    %13 = vsyncpa [#allocation6], 0
    // Predicated region
    $region2: #{tpu_custom_call.1} parent=1 // pred_check
      _
    $region3: #{tpu_custom_call.1} parent=1 // pred_check_branch
      %15 = sbr.rel (0) target = $region5
    $region4: #{tpu_custom_call.1} parent=1 // pred_region
      %s17 = ssub.s32 128, 128
      %18 = vsyncadd [#allocation4], %s17
      %s20 = sshll.u32 [#allocation3], 4
      %s21 = int_to_ptr.vmem [resolvable:$true] %s20
      %23 = dma.hbm_to_vmem [thread:$0]  %s0, 128, %s21, [#allocation4]
    $region5: #{tpu_custom_call.1} parent=1 // pred_fallthru
      _
    // Predicated region
    $region6: #{tpu_custom_call.1} parent=1 // pred_check
      _
    $region7: #{tpu_custom_call.1} parent=1 // pred_check_branch
      %25 = sbr.rel (0) target = $region9
    $region8: #{tpu_custom_call.1} parent=1 // pred_region
      %s27 = ssub.s32 512, 512
      %28 = vsyncadd [#allocation6], %s27
      %s29 = sshll.u32 [#allocation5], 4
      %s30 = int_to_ptr.vmem [resolvable:$true] %s29
      %35 = dma.hbm_to_vmem [thread:$0]  %s1, 512, %s30, [#allocation6], 128, 128, 8
    $region9: #{tpu_custom_call.1} parent=1 // pred_fallthru
      _
    // Predicated region
    $region10: #{tpu_custom_call.1} parent=1 // pred_check
      _
    $region11: #{tpu_custom_call.1} parent=1 // pred_check_branch
      %37 = sbr.rel (0) target = $region13
    $region12: #{tpu_custom_call.1} parent=1 // pred_region
      _
    $region13: #{tpu_custom_call.1} parent=1 // pred_fallthru
      _
    // Predicated region
    $region14: #{tpu_custom_call.1} parent=1 // pred_check
      _
    $region15: #{tpu_custom_call.1} parent=1 // pred_check_branch
      %39 = sbr.rel (0) target = $region17
    $region16: #{tpu_custom_call.1} parent=1 // pred_region
      _
    $region17: #{tpu_custom_call.1} parent=1 // pred_fallthru
      _
    // Predicated region
    $region18: #{tpu_custom_call.1} parent=1 // pred_check
      _
    $region19: #{tpu_custom_call.1} parent=1 // pred_check_branch
      %41 = sbr.rel (0) target = $region21
    $region20: #{tpu_custom_call.1} parent=1 // pred_region
      _
    $region21: #{tpu_custom_call.1} parent=1 // pred_fallthru
      _
    // Predicated region
    $region22: #{tpu_custom_call.1} parent=1 // pred_check
      _
    $region23: #{tpu_custom_call.1} parent=1 // pred_check_branch
      %43 = sbr.rel (0) target = $region25
    $region24: #{tpu_custom_call.1} parent=1 // pred_region
      %44 = dma.done [#allocation4], 128
    $region25: #{tpu_custom_call.1} parent=1 // pred_fallthru
      _
    // Predicated region
    $region26: #{tpu_custom_call.1} parent=1 // pred_check
      _
    $region27: #{tpu_custom_call.1} parent=1 // pred_check_branch
      %46 = sbr.rel (0) target = $region29
    $region28: #{tpu_custom_call.1} parent=1 // pred_region
      %47 = dma.done [#allocation6], 512
    $region29: #{tpu_custom_call.1} parent=1 // pred_fallthru
      _
    %v48 = vld [vmem:[#allocation3] sm:$0xff]
    %v49 = vld [vmem:[#allocation5] sm:$0xff]
    %v50 = vld [vmem:[#allocation5 + $0x8] sm:$0xff]
    %v51 = vld [vmem:[#allocation5 + $0x10] sm:$0xff]
    %v52 = vld [vmem:[#allocation5 + $0x18] sm:$0xff]
    %v53 = vld [vmem:[%s2] sm:$0x1]
    %v55 = vlaneseq
    %v56 = vshrl.u32 %v55, 7
    %v57 = vsub.s32 0, %v56
    %v58 = vrot.slane %v53, %v57
    %vm60 = vcmask 261120
    %v62 = vsel %vm60, %v48, 0
    %64 = vmatprep.subr.mxu0 0.0
    %65 = vmatpush1.msra.mxu0 %v49
    %66 = vmatprep.subr.mxu0 0.0
    %67 = vmatpush1.msra.mxu0 %v50
    %68 = vmatprep.subr.mxu0 0.0
    %69 = vmatpush1.msra.mxu0 %v51
    %70 = vmatprep.subr.mxu0 0.0
    %71 = vmatpush1.msra.mxu0 %v52
    %72 = vmatprep.subr.mxu0 0.0
    %73 = vmatpush1.msra.mxu0 0.0
    %74 = vmatprep.subr.mxu0 0.0
    %75 = vmatpush1.msra.mxu0 0.0
    %76 = vmatprep.subr.mxu0 0.0
    %77 = vmatpush1.msra.mxu0 0.0
    %78 = vmatprep.subr.mxu0 0.0
    %79 = vmatpush1.msra.mxu0 0.0
    %80 = vmatprep.subr.mxu0 0.0
    %81 = vmatpush1.msra.mxu0 0.0
    %82 = vmatprep.subr.mxu0 0.0
    %83 = vmatpush1.msra.mxu0 0.0
    %84 = vmatprep.subr.mxu0 0.0
    %85 = vmatpush1.msra.mxu0 0.0
    %86 = vmatprep.subr.mxu0 0.0
    %87 = vmatpush1.msra.mxu0 0.0
    %88 = vmatprep.subr.mxu0 0.0
    %89 = vmatpush1.msra.mxu0 0.0
    %90 = vmatprep.subr.mxu0 0.0
    %91 = vmatpush1.msra.mxu0 0.0
    %92 = vmatprep.subr.mxu0 0.0
    %93 = vmatpush1.msra.mxu0 0.0
    %94 = vmatprep.subr.mxu0 0.0
    %95 = vmatpush1.msra.mxu0 0.0
    %96 = vmatprep.subr.mxu0 0.0
    %97 = vmatpush1.msra.mxu0 0.0
    %98 = vmatprep.subr.mxu0 0.0
    %99 = vmatpush1.msra.mxu0 0.0
    %100 = vmatprep.subr.mxu0 0.0
    %101 = vmatpush1.msra.mxu0 0.0
    %102 = vmatprep.subr.mxu0 0.0
    %103 = vmatpush1.msra.mxu0 0.0
    %104 = vmatprep.subr.mxu0 0.0
    %105 = vmatpush1.msra.mxu0 0.0
    %106 = vmatprep.subr.mxu0 0.0
    %107 = vmatpush1.msra.mxu0 0.0
    %108 = vmatprep.subr.mxu0 0.0
    %109 = vmatpush1.msra.mxu0 0.0
    %110 = vmatprep.subr.mxu0 0.0
    %111 = vmatpush1.msra.mxu0 0.0
    %112 = vmatprep.subr.mxu0 0.0
    %113 = vmatpush1.msra.mxu0 0.0
    %114 = vmatprep.subr.mxu0 0.0
    %115 = vmatpush1.msra.mxu0 0.0
    %116 = vmatprep.subr.mxu0 0.0
    %117 = vmatpush1.msra.mxu0 0.0
    %118 = vmatprep.subr.mxu0 0.0
    %119 = vmatpush1.msra.mxu0 0.0
    %120 = vmatprep.subr.mxu0 0.0
    %121 = vmatpush1.msra.mxu0 0.0
    %122 = vmatprep.subr.mxu0 0.0
    %123 = vmatpush1.msra.mxu0 0.0
    %124 = vmatprep.subr.mxu0 0.0
    %125 = vmatpush1.msra.mxu0 0.0
    %126 = vmatprep.subr.mxu0 0.0
    %127 = vmatpush1.msra.mxu0 0.0
    %128 = vmatprep.mubr.f32.mxu0 0.0
    %129 = vmatmul.mubr.f32.gmra.mrb[0].mxu0 %v62
    %v130 = vpop.f32.mrb[0].mxu0
    %v131 = vadd.f32 %v58, %v130
    %v132 = vpop.f32.mrb[0].mxu0
    %133 = vdwg.mxu0
    %v134 = vmax.f32 %v131, 0.0
    %vm135 = vcmask 523264
    %v136 = vsel %vm135, %v134, 0.0
    %137 = vadd.xlane.f32.xlu0 %v136
    %v138 = vpop.xlane.xlu0 %137
    %v139 = vmul.f32 %v134, %v134
    %v140 = vsel %vm135, %v139, 0.0
    %141 = vadd.xlane.f32.xlu0 %v140
    %v142 = vpop.xlane.xlu0 %141
    %v143 = vmul.f32 %v138, 0.015625
    %v144 = vmul.f32 %v142, 0.015625
    %v145 = vmul.f32 %v143, %v143
    %v146 = vsub.f32 %v144, %v145
    %v147 = vadd.f32 %v146, 1e-05
    %v148 = vrsqrt.pop %v147
    %v149 = vsub.f32 %v134, %v143
    %v150 = vld [vmem:[%s3] sm:$0x1]
    %v152 = vlaneseq
    %v153 = vshrl.u32 %v152, 7
    %v154 = vsub.s32 0, %v153
    %v155 = vrot.slane %v150, %v154
    %v157 = vmul.f32 %v149, %v155
    %v158 = vsel %vm135, %v157, 0.0
    %159 = vadd.xlane.f32.xlu0 %v158
    %v160 = vpop.xlane.xlu0 %159
    %v161 = vmul.f32 %v160, %v148
    %v162 = vld [vmem:[#allocation2] sm:$0x1]
    %v164 = vlaneseq
    %v165 = vshrl.u32 %v164, 7
    %v166 = vsub.s32 0, %v165
    %v167 = vrot.slane %v162, %v166
    %v169 = vadd.f32 %v161, %v167
    %vm170 = vcmask 7168
    %171 = vst.msk [vmem:[%s5] sm:$0xff] %vm170, %v169
    // Predicated region
    $region30: #{tpu_custom_call.1} parent=1 // pred_check
      _
    $region31: #{tpu_custom_call.1} parent=1 // pred_check_branch
      %173 = sbr.rel (0) target = $region33
    $region32: #{tpu_custom_call.1} parent=1 // pred_region
      _
    $region33: #{tpu_custom_call.1} parent=1 // pred_fallthru
      _
    // Predicated region
    $region34: #{tpu_custom_call.1} parent=1 // pred_check
      _
    $region35: #{tpu_custom_call.1} parent=1 // pred_check_branch
      %175 = sbr.rel (0) target = $region37
    $region36: #{tpu_custom_call.1} parent=1 // pred_region
      _
    $region37: #{tpu_custom_call.1} parent=1 // pred_fallthru
      _
    %176 = vsyncpa [#allocation4], 1
    %177 = vsyncpa [#allocation6], 1

</llo_original>
